<compile_context>
chip_gen: v5e
topology: v5e:2x2
jax: 0.10.0
libtpu: 0.0.40
codegen_flags: <defaults>
</compile_context>

<pallas_src>
import math
from functools import partial

import jax
import jax.numpy as jnp
from jax.experimental import pallas as pl
from jax.experimental.pallas import tpu as pltpu

_MASK_FILL = float(-(2 ** 32) + 1)   # matches the module's self.inf


def _flash_attn_kernel(q_ref, k_ref, v_ref, o_ref,
                       m_scr, l_scr, acc_scr,
                       *, scale, mask_value, tl, ts):
    qi = pl.program_id(2)
    ki = pl.program_id(3)

    @pl.when(ki == 0)
    def _init():
        m_scr[...] = jnp.full_like(m_scr, -jnp.inf)
        l_scr[...] = jnp.zeros_like(l_scr)
        acc_scr[...] = jnp.zeros_like(acc_scr)

    # Skip kv tiles that lie entirely above the causal diagonal.
    @pl.when(ki * ts <= (qi + 1) * tl - 1)
    def _compute():
        # QK^T, contracting the last axis of both operands (no explicit Kᵀ).
        s = jax.lax.dot_general(
            q_ref[...], k_ref[...],
            (((1,), (1,)), ((), ())),
            preferred_element_type=jnp.float32)                   # (tl, ts) f32

        # Causal mask with the module's finite fill value; scale applied AFTER
        # masking, exactly as in the reference forward.
        l_idx = jax.lax.broadcasted_iota(jnp.int32, (tl, ts), 0) + qi * tl
        s_idx = jax.lax.broadcasted_iota(jnp.int32, (tl, ts), 1) + ki * ts
        x = jnp.where(l_idx >= s_idx, s, mask_value) * scale

        m_prev = m_scr[...]
        m_new = jnp.maximum(m_prev, jnp.max(x, axis=-1, keepdims=True))
        alpha = jnp.exp(m_prev - m_new)
        p = jnp.exp(x - m_new)

        l_scr[...] = alpha * l_scr[...] + jnp.sum(p, axis=-1, keepdims=True)
        acc_scr[...] = alpha * acc_scr[...] + jnp.dot(
            p.astype(v_ref.dtype), v_ref[...],
            preferred_element_type=jnp.float32)
        m_scr[...] = m_new

    @pl.when(ki == pl.num_programs(3) - 1)
    def _finalize():
        # Exact reciprocal: only (tl, 1) elements, accuracy for free.
        inv = pl.reciprocal(l_scr[...], approx=False)
        o_ref[...] = (acc_scr[...] * inv).astype(o_ref.dtype)


def _choose_tile(dim, target):
    """Largest tile <= target that divides dim and is sublane-friendly."""
    if dim <= target:
        return dim
    for t in range(min(target, dim), 0, -1):
        if dim % t == 0 and t % 8 == 0:
            return t
    return dim   # fall back to the untiled full dimension


def m_full_attention_forward(queries, keys, values, attn_mask=None, *,
                             scale=None, block_q=128, block_kv=128):
    """queries: (B, L, H, E), keys: (B, S, H, E), values: (B, S, H, D)."""
    # TODO(synk): optional attn_mask (None in this example) is not wired in.
    del attn_mask
    B, L, H, E = queries.shape
    _, S, _, D = values.shape
    scale = float(scale) if scale is not None else 1.0 / math.sqrt(E)

    # Layout plumbing: heads next to batch so each kernel block is a
    # contiguous, lane-dense (seq_tile, head_dim) slab.
    q = jnp.transpose(queries, (0, 2, 1, 3))   # (B, H, L, E)
    k = jnp.transpose(keys, (0, 2, 1, 3))      # (B, H, S, E)
    v = jnp.transpose(values, (0, 2, 1, 3))    # (B, H, S, D)

    tl = _choose_tile(L, block_q)
    ts = _choose_tile(S, block_kv)
    nl, ns = L // tl, S // ts

    kernel = partial(_flash_attn_kernel,
                     scale=scale, mask_value=_MASK_FILL, tl=tl, ts=ts)

    out = pl.pallas_call(
        kernel,
        out_shape=jax.ShapeDtypeStruct((B, H, L, D), queries.dtype),
        grid_spec=pltpu.PrefetchScalarGridSpec(
            num_scalar_prefetch=0,
            grid=(B, H, nl, ns),
            in_specs=[
                pl.BlockSpec((None, None, tl, E),
                             lambda b, h, qi, ki: (b, h, qi, 0)),
                pl.BlockSpec((None, None, ts, E),
                             lambda b, h, qi, ki: (b, h, ki, 0)),
                pl.BlockSpec((None, None, ts, D),
                             lambda b, h, qi, ki: (b, h, ki, 0)),
            ],
            out_specs=pl.BlockSpec((None, None, tl, D),
                                   lambda b, h, qi, ki: (b, h, qi, 0)),
            scratch_shapes=[
                pltpu.VMEM((tl, 1), jnp.float32),   # running max  m
                pltpu.VMEM((tl, 1), jnp.float32),   # running sum  l
                pltpu.VMEM((tl, D), jnp.float32),   # f32 output accumulator
            ],
        ),
        compiler_params=pltpu.CompilerParams(
            dimension_semantics=("parallel", "parallel", "parallel", "arbitrary"),
            vmem_limit_bytes=32 * 1024 * 1024,      # explicit; safe on v5e/v6e/v7x
        ),
    )(q, k, v)

    return jnp.transpose(out, (0, 2, 1, 3))   # (B, L, H, D)


def reference_forward(queries, keys, values, scale=None):
    """Pure-JAX mirror of PyTorch M_FullAttention.forward (attn_mask=None).

    Uses precision=HIGHEST so the f32 baseline is not silently truncated to
    bf16 on the TPU MXU (that truncation was the source of the previous
    6.6e-3 mismatch against the kernel's f32 accumulation).
    """
    B, L, H, E = queries.shape
    _, S, _, D = values.shape
    scale = scale if scale is not None else 1.0 / math.sqrt(E)
    scores = jnp.einsum("blhe,bshe->bhls", queries, keys,
                        precision=jax.lax.Precision.HIGHEST)
    causal = jnp.tril(jnp.ones((L, S), dtype=bool))
    scores = jnp.where(causal[None, None], scores, _MASK_FILL)
    A = jax.nn.softmax(scale * scores, axis=-1)
    return jnp.einsum("bhls,bshd->blhd", A, values,
                      precision=jax.lax.Precision.HIGHEST)


if __name__ == "__main__":
    B, L, S, H, E, D = 2, 8, 8, 4, 32, 32

    key = jax.random.PRNGKey(0)
    kq, kk, kv = jax.random.split(key, 3)
    queries = jax.random.normal(kq, (B, L, H, E), jnp.float32)
    keys = jax.random.normal(kk, (B, S, H, E), jnp.float32)
    values = jax.random.normal(kv, (B, S, H, D), jnp.float32)

    out = m_full_attention_forward(queries, keys, values)
    out = jax.block_until_ready(out)

    ref = reference_forward(queries, keys, values)
    assert out.shape == (B, L, H, D)
    # Tolerance covers residual MXU multi-pass rounding of f32 matmuls plus
    # online-softmax reassociation; typical observed error is << 1e-3.
    err = float(jnp.max(jnp.abs(out - ref)))
    assert jnp.allclose(out, ref, atol=1e-2, rtol=1e-2), err

    print("KERNEL_OK")
</pallas_src>

<mosaic_0001>
module attributes {stable_mosaic.version = 11 : i64} {
  func.func @_flash_attn_kernel(%arg0: i32, %arg1: i32, %arg2: i32, %arg3: i32, %arg4: memref<1x1x8x32xf32, #tpu.memory_space<vmem>>, %arg5: memref<1x1x8x32xf32, #tpu.memory_space<vmem>>, %arg6: memref<1x1x8x32xf32, #tpu.memory_space<vmem>>, %arg7: memref<1x1x8x32xf32, #tpu.memory_space<vmem>>, %arg8: memref<8x1xf32, #tpu.memory_space<vmem>>, %arg9: memref<8x1xf32, #tpu.memory_space<vmem>>, %arg10: memref<8x32xf32, #tpu.memory_space<vmem>>) attributes {dimension_semantics = [#tpu.dimension_semantics<parallel>, #tpu.dimension_semantics<parallel>, #tpu.dimension_semantics<parallel>, #tpu.dimension_semantics<arbitrary>], iteration_bounds = array<i64: 2, 4, 1, 1>, scalar_prefetch = 0 : i64, scratch_operands = 3 : i64, tpu.core_type = #tpu.core_type<tc>, window_params = [{transform_indices = @transform_0, window_bounds = array<i64: 1, 1, 8, 32>}, {transform_indices = @transform_1, window_bounds = array<i64: 1, 1, 8, 32>}, {transform_indices = @transform_2, window_bounds = array<i64: 1, 1, 8, 32>}, {transform_indices = @transform_3, window_bounds = array<i64: 1, 1, 8, 32>}]} {
    %c0_i32 = arith.constant 0 : i32
    %0 = arith.cmpi eq, %arg3, %c0_i32 : i32
    %1 = arith.extui %0 : i1 to i32
    %c0_i32_0 = arith.constant 0 : i32
    %2 = arith.cmpi ne, %1, %c0_i32_0 : i32
    scf.if %2 {
      %cst = arith.constant 0xFF800000 : f32
      %13 = vector.broadcast %cst : f32 to vector<8x1xf32>
      %c0 = arith.constant 0 : index
      %c0_6 = arith.constant 0 : index
      %14 = vector.load %arg8[%c0, %c0_6] : memref<8x1xf32, #tpu.memory_space<vmem>>, vector<8x1xf32>
      tpu.vector_store %arg8[%c0, %c0_6], %13 {strides = array<i32>} : memref<8x1xf32, #tpu.memory_space<vmem>>, vector<8x1xf32>,
      %cst_7 = arith.constant 0.000000e+00 : f32
      %15 = vector.broadcast %cst_7 : f32 to vector<8x1xf32>
      %c0_8 = arith.constant 0 : index
      %c0_9 = arith.constant 0 : index
      %16 = vector.load %arg9[%c0_8, %c0_9] : memref<8x1xf32, #tpu.memory_space<vmem>>, vector<8x1xf32>
      tpu.vector_store %arg9[%c0_8, %c0_9], %15 {strides = array<i32>} : memref<8x1xf32, #tpu.memory_space<vmem>>, vector<8x1xf32>,
      %cst_10 = arith.constant 0.000000e+00 : f32
      %17 = vector.broadcast %cst_10 : f32 to vector<8x32xf32>
      %c0_11 = arith.constant 0 : index
      %c0_12 = arith.constant 0 : index
      %18 = vector.load %arg10[%c0_11, %c0_12] : memref<8x32xf32, #tpu.memory_space<vmem>>, vector<8x32xf32>
      tpu.vector_store %arg10[%c0_11, %c0_12], %17 {strides = array<i32>} : memref<8x32xf32, #tpu.memory_space<vmem>>, vector<8x32xf32>,
    } else {
    }
    %c8_i32 = arith.constant 8 : i32
    %3 = arith.muli %arg3, %c8_i32 : i32
    %c1_i32 = arith.constant 1 : i32
    %4 = arith.addi %arg2, %c1_i32 : i32
    %c8_i32_1 = arith.constant 8 : i32
    %5 = arith.muli %4, %c8_i32_1 : i32
    %c1_i32_2 = arith.constant 1 : i32
    %6 = arith.subi %5, %c1_i32_2 : i32
    %7 = arith.cmpi sle, %3, %6 : i32
    %8 = arith.extui %7 : i1 to i32
    %c0_i32_3 = arith.constant 0 : i32
    %9 = arith.cmpi ne, %8, %c0_i32_3 : i32
    scf.if %9 {
      %c0 = arith.constant 0 : index
      %c0_6 = arith.constant 0 : index
      %c0_7 = arith.constant 0 : index
      %c0_8 = arith.constant 0 : index
      %13 = vector.load %arg4[%c0, %c0_6, %c0_7, %c0_8] : memref<1x1x8x32xf32, #tpu.memory_space<vmem>>, vector<1x1x8x32xf32>
      %14 = vector.shape_cast %13 : vector<1x1x8x32xf32> to vector<8x32xf32>
      %c0_9 = arith.constant 0 : index
      %c0_10 = arith.constant 0 : index
      %c0_11 = arith.constant 0 : index
      %c0_12 = arith.constant 0 : index
      %15 = vector.load %arg5[%c0_9, %c0_10, %c0_11, %c0_12] : memref<1x1x8x32xf32, #tpu.memory_space<vmem>>, vector<1x1x8x32xf32>
      %16 = vector.shape_cast %15 : vector<1x1x8x32xf32> to vector<8x32xf32>
      %cst = arith.constant dense<0.000000e+00> : vector<8x8xf32>
      %17 = tpu.matmul %14, %16, %cst {dimension_numbers = #tpu.dot_dimension_numbers<[1], [1], [0], [0], [0, 0, 1, 0], [], []>} : vector<8x32xf32>, vector<8x32xf32>, vector<8x8xf32> -> vector<8x8xf32>
      %18 = tpu.iota {dimensions = array<i32: 0>} : vector<8x8xi32>
      %c8_i32_13 = arith.constant 8 : i32
      %19 = arith.muli %arg2, %c8_i32_13 : i32
      %20 = vector.broadcast %19 : i32 to vector<8x8xi32>
      %21 = arith.addi %18, %20 : vector<8x8xi32>
      %22 = tpu.iota {dimensions = array<i32: 1>} : vector<8x8xi32>
      %c8_i32_14 = arith.constant 8 : i32
      %23 = arith.muli %arg3, %c8_i32_14 : i32
      %24 = vector.broadcast %23 : i32 to vector<8x8xi32>
      %25 = arith.addi %22, %24 : vector<8x8xi32>
      %26 = arith.cmpi sge, %21, %25 : vector<8x8xi32>
      %cst_15 = arith.constant -4.2949673E+9 : f32
      %27 = vector.broadcast %cst_15 : f32 to vector<8x8xf32>
      %28 = arith.select %26, %17, %27 : vector<8x8xi1>, vector<8x8xf32>
      %cst_16 = arith.constant 0.176776692 : f32
      %29 = vector.broadcast %cst_16 : f32 to vector<8x8xf32>
      %30 = arith.mulf %28, %29 : vector<8x8xf32>
      %c0_17 = arith.constant 0 : index
      %c0_18 = arith.constant 0 : index
      %31 = vector.load %arg8[%c0_17, %c0_18] : memref<8x1xf32, #tpu.memory_space<vmem>>, vector<8x1xf32>
      %cst_19 = arith.constant dense<0xFF800000> : vector<8xf32>
      %32 = vector.multi_reduction <maximumf>, %30, %cst_19 [1] : vector<8x8xf32> to vector<8xf32>
      %33 = vector.shape_cast %32 : vector<8xf32> to vector<8x1xf32>
      %34 = arith.maximumf %31, %33 : vector<8x1xf32>
      %35 = arith.subf %31, %34 : vector<8x1xf32>
      %36 = math.exp %35 : vector<8x1xf32>
      %37 = vector.broadcast %34 : vector<8x1xf32> to vector<8x8xf32>
      %38 = arith.subf %30, %37 : vector<8x8xf32>
      %39 = math.exp %38 : vector<8x8xf32>
      %c0_20 = arith.constant 0 : index
      %c0_21 = arith.constant 0 : index
      %40 = vector.load %arg9[%c0_20, %c0_21] : memref<8x1xf32, #tpu.memory_space<vmem>>, vector<8x1xf32>
      %41 = arith.mulf %36, %40 : vector<8x1xf32>
      %cst_22 = arith.constant dense<0.000000e+00> : vector<8xf32>
      %42 = vector.multi_reduction <add>, %39, %cst_22 [1] : vector<8x8xf32> to vector<8xf32>
      %43 = vector.shape_cast %42 : vector<8xf32> to vector<8x1xf32>
      %44 = arith.addf %41, %43 : vector<8x1xf32>
      %c0_23 = arith.constant 0 : index
      %c0_24 = arith.constant 0 : index
      %45 = vector.load %arg9[%c0_23, %c0_24] : memref<8x1xf32, #tpu.memory_space<vmem>>, vector<8x1xf32>
      tpu.vector_store %arg9[%c0_23, %c0_24], %44 {strides = array<i32>} : memref<8x1xf32, #tpu.memory_space<vmem>>, vector<8x1xf32>,
      %c0_25 = arith.constant 0 : index
      %c0_26 = arith.constant 0 : index
      %46 = vector.load %arg10[%c0_25, %c0_26] : memref<8x32xf32, #tpu.memory_space<vmem>>, vector<8x32xf32>
      %47 = vector.broadcast %36 : vector<8x1xf32> to vector<8x32xf32>
      %48 = arith.mulf %47, %46 : vector<8x32xf32>
      %c0_27 = arith.constant 0 : index
      %c0_28 = arith.constant 0 : index
      %c0_29 = arith.constant 0 : index
      %c0_30 = arith.constant 0 : index
      %49 = vector.load %arg6[%c0_27, %c0_28, %c0_29, %c0_30] : memref<1x1x8x32xf32, #tpu.memory_space<vmem>>, vector<1x1x8x32xf32>
      %50 = vector.shape_cast %49 : vector<1x1x8x32xf32> to vector<8x32xf32>
      %cst_31 = arith.constant dense<0.000000e+00> : vector<8x32xf32>
      %51 = tpu.matmul %39, %50, %cst_31 {dimension_numbers = #tpu.dot_dimension_numbers<[1], [0], [0], [1], [0, 0, 1, 1], [], []>} : vector<8x8xf32>, vector<8x32xf32>, vector<8x32xf32> -> vector<8x32xf32>
      %52 = arith.addf %48, %51 : vector<8x32xf32>
      %c0_32 = arith.constant 0 : index
      %c0_33 = arith.constant 0 : index
      %53 = vector.load %arg10[%c0_32, %c0_33] : memref<8x32xf32, #tpu.memory_space<vmem>>, vector<8x32xf32>
      tpu.vector_store %arg10[%c0_32, %c0_33], %52 {strides = array<i32>} : memref<8x32xf32, #tpu.memory_space<vmem>>, vector<8x32xf32>,
      %c0_34 = arith.constant 0 : index
      %c0_35 = arith.constant 0 : index
      %54 = vector.load %arg8[%c0_34, %c0_35] : memref<8x1xf32, #tpu.memory_space<vmem>>, vector<8x1xf32>
      tpu.vector_store %arg8[%c0_34, %c0_35], %34 {strides = array<i32>} : memref<8x1xf32, #tpu.memory_space<vmem>>, vector<8x1xf32>,
    } else {
    }
    %c0_i32_4 = arith.constant 0 : i32
    %10 = arith.cmpi eq, %arg3, %c0_i32_4 : i32
    %11 = arith.extui %10 : i1 to i32
    %c0_i32_5 = arith.constant 0 : i32
    %12 = arith.cmpi ne, %11, %c0_i32_5 : i32
    scf.if %12 {
      %c0 = arith.constant 0 : index
      %c0_6 = arith.constant 0 : index
      %13 = vector.load %arg9[%c0, %c0_6] : memref<8x1xf32, #tpu.memory_space<vmem>>, vector<8x1xf32>
      %14 = tpu.reciprocal %13 : vector<8x1xf32> -> vector<8x1xf32>
      %c0_7 = arith.constant 0 : index
      %c0_8 = arith.constant 0 : index
      %15 = vector.load %arg10[%c0_7, %c0_8] : memref<8x32xf32, #tpu.memory_space<vmem>>, vector<8x32xf32>
      %16 = vector.broadcast %14 : vector<8x1xf32> to vector<8x32xf32>
      %17 = arith.mulf %15, %16 : vector<8x32xf32>
      %c0_9 = arith.constant 0 : index
      %c0_10 = arith.constant 0 : index
      %c0_11 = arith.constant 0 : index
      %c0_12 = arith.constant 0 : index
      %18 = vector.load %arg7[%c0_9, %c0_10, %c0_11, %c0_12] : memref<1x1x8x32xf32, #tpu.memory_space<vmem>>, vector<1x1x8x32xf32>
      %19 = vector.shape_cast %18 : vector<1x1x8x32xf32> to vector<8x32xf32>
      %20 = vector.shape_cast %17 : vector<8x32xf32> to vector<1x1x8x32xf32>
      tpu.vector_store %arg7[%c0_9, %c0_10, %c0_11, %c0_12], %20 {strides = array<i32>} : memref<1x1x8x32xf32, #tpu.memory_space<vmem>>, vector<1x1x8x32xf32>,
    } else {
    }
    return
  }
  func.func @transform_0(%arg0: i32, %arg1: i32, %arg2: i32, %arg3: i32) -> (i32, i32, i32, i32) {
    %c0_i32 = arith.constant 0 : i32
    %c0_i32_0 = arith.constant 0 : i32
    return %arg0, %arg1, %arg2, %c0_i32 : i32, i32, i32, i32
  }
  func.func @transform_1(%arg0: i32, %arg1: i32, %arg2: i32, %arg3: i32) -> (i32, i32, i32, i32) {
    %c0_i32 = arith.constant 0 : i32
    %c0_i32_0 = arith.constant 0 : i32
    return %arg0, %arg1, %arg3, %c0_i32 : i32, i32, i32, i32
  }
  func.func @transform_2(%arg0: i32, %arg1: i32, %arg2: i32, %arg3: i32) -> (i32, i32, i32, i32) {
    %c0_i32 = arith.constant 0 : i32
    %c0_i32_0 = arith.constant 0 : i32
    return %arg0, %arg1, %arg3, %c0_i32 : i32, i32, i32, i32
  }
  func.func @transform_3(%arg0: i32, %arg1: i32, %arg2: i32, %arg3: i32) -> (i32, i32, i32, i32) {
    %c0_i32 = arith.constant 0 : i32
    %c0_i32_0 = arith.constant 0 : i32
    return %arg0, %arg1, %arg2, %c0_i32 : i32, i32, i32, i32
  }
}

</mosaic_0001>

<llo_original>
// kernel: tpu_custom_call.1
$region0: #{tpu_custom_call.1}
  #allocation0 [shape = 'u32[]', space=smem, size = 0x4, offset = 0x4, fixed_abs, tag = 'smem constant byte address 0x4 - core index']
  #allocation1 [shape = 'u32[72,128]{1,0:T(1,128)}', space=vmem, size = 0x9000, scoped, tag = 'internal scratch']
  #allocation2 [shape = 'f32[8,1]{1,0:T(8,128)}', space=vmem, size = 0x1000, scoped, tag = 'scratch operand']
  #allocation3 [shape = 'f32[8,1]{1,0:T(8,128)}', space=vmem, size = 0x1000, scoped, tag = 'scratch operand']
  #allocation4 [shape = 'f32[8,32]{1,0:T(8,128)}', space=vmem, size = 0x1000, scoped, tag = 'scratch operand']
  %s0 = inlined_call_operand.hbm [shape: f32[2,4,8,32], index: 0, kind: input, shape index: {}]
  %s1 = inlined_call_operand.hbm [shape: f32[2,4,8,32], index: 1, kind: input, shape index: {}]
  %s2 = inlined_call_operand.hbm [shape: f32[2,4,8,32], index: 2, kind: input, shape index: {}]
  %s3 = inlined_call_operand.hbm [shape: f32[2,4,8,32], index: 3, kind: output, shape index: {}]
  %s4 = sld [smem:[#allocation0]]
  $region69: #{tpu_custom_call.1} parent=0
    _
  %s6 = ssub.s32 1, %s4
  %s7 = scalar_select 0, %s6, %s4
  $region1: #{tpu_custom_call.1} parent=0
    #allocation5 [shape = 'u8[8192]{0}', space=vmem, size = 0x2000, scoped, tag = 'input window, operand 0']
    #allocation6 [shape = 's32[2]{0}', space=sflag, size = 0x8, scoped, tag = 'scoped memory for tpu_custom_call.1']
    #allocation7 [shape = 's32[2]{0}', space=sflag, size = 0x8, scoped, tag = 'scoped memory for tpu_custom_call.1']
    #allocation8 [shape = 'u8[8192]{0}', space=vmem, size = 0x2000, scoped, tag = 'input window, operand 1']
    #allocation9 [shape = 's32[2]{0}', space=sflag, size = 0x8, scoped, tag = 'scoped memory for tpu_custom_call.1']
    #allocation10 [shape = 'u8[8192]{0}', space=vmem, size = 0x2000, scoped, tag = 'input window, operand 2']
    #allocation11 [shape = 'u8[8192]{0}', space=vmem, size = 0x2000, scoped, tag = 'output window, operand 0']
    %8 = vsyncpa [#allocation6], 0
    %s9 = scalar_lea.sflag [#allocation6], 1
    %10 = vsyncpa %s9, 0
    %11 = vsyncpa [#allocation9], 0
    %s12 = scalar_lea.sflag [#allocation9], 1
    %13 = vsyncpa %s12, 0
    %14 = vsyncpa [#allocation7], 0
    %s15 = scalar_lea.sflag [#allocation7], 1
    %16 = vsyncpa %s15, 0
    loop: start=0, step=1, limit=10
    $region2: #{tpu_custom_call.1} parent=1 // loop_pre_header
      _
    $region3: #{tpu_custom_call.1} parent=1 // loop_header
      %s18 = sphi 0, %s22
      %p19 = scmp.ge.s32.totalorder %s18, 10
      %s25 = sphi 0, %s51
      %s26 = sphi 0, %s47
      %s27 = sphi 0, %s43
      %s28 = sphi 0, %s39
      %s29 = sphi 0, %s25
      %s30 = sphi 0, %s26
      %s31 = sphi 0, %s27
      %s32 = sphi 0, %s28
      %s33 = sphi 0, %s29
      %s34 = sphi 0, %s30
      %s35 = sphi 0, %s31
      %s36 = sphi 0, %s32
      %s58 = sphi 0, %s60
      %s61 = sphi 0, %s58
      %s62 = sphi 0, %s61
      %s78 = sphi 0, %s62
      %s88 = sphi 0, %s90
      %s91 = sphi 0, %s88
      %s92 = sphi 0, %s91
      %s108 = sphi 0, %s92
      %s118 = sphi 0, %s120
      %s121 = sphi 0, %s118
      %s122 = sphi 0, %s121
      %s138 = sphi 0, %s122
      %s148 = sphi 0, %s150
      %s151 = sphi 0, %s148
      %s152 = sphi 0, %s151
      %s168 = sphi 0, %s152
    $region4: #{tpu_custom_call.1} parent=1 // loop_header_branch
      %21 = sbr.rel (%p19) target = $region8
    $region5: #{tpu_custom_call.1} parent=1 // loop_body
      %s23 = ssub.s32 %s18, 1
      %s24 = ssub.s32 %s18, 2
      %s37 = sadd.s32 1, %s28
      %p38 = scmp.ge.s32.totalorder %s37, 1
      %s39 = scalar_select %p38, 0, %s37
      %s40 = sadd.s32 1, %s27
      %s41 = scalar_select %p38, %s40, %s27
      %p42 = scmp.ge.s32.totalorder %s41, 1
      %s43 = scalar_select %p42, 0, %s41
      %s44 = sadd.s32 1, %s26
      %s45 = scalar_select %p42, %s44, %s26
      %p46 = scmp.ge.s32.totalorder %s45, 4
      %s47 = scalar_select %p46, 0, %s45
      %s48 = sadd.s32 1, %s25
      %s49 = scalar_select %p46, %s48, %s25
      %p50 = scmp.ge.s32.totalorder %s49, 2
      %s51 = scalar_select %p50, 0, %s49
      %s52 = ssub.s32 %s25, %s51
      %s53 = ssub.s32 %s26, %s47
      %s54 = sor.u32 %s52, %s53
      %s55 = ssub.s32 %s27, %s43
      %s56 = sor.u32 %s54, %s55
      %p57 = scmp.eq.s32.totalorder %s56, 0
      %s59 = sadd.s32 %s58, 1
      %s60 = scalar_select %p57, %s58, %s59
      %p63 = pneg %p57
      %p64 = scmp.eq.s32.totalorder %s18, 7
      %p65 = por %p63, %p64
      %p66 = scmp.ne.s32.totalorder %s58, %s61
      %p67 = scmp.eq.s32.totalorder %s18, 0
      %p68 = por %p66, %p67
      %p69 = scmp.ne.s32.totalorder %s58, %s61
      %p70 = scmp.eq.s32.totalorder %s23, 7
      %p71 = por %p69, %p70
      %p72 = scmp.ne.s32.totalorder %s61, %s62
      %p73 = scmp.eq.s32.totalorder %s23, 0
      %p74 = por %p72, %p73
      %p75 = scmp.ne.s32.totalorder %s61, %s62
      %p76 = scmp.eq.s32.totalorder %s24, 7
      %p77 = por %p75, %p76
      %p79 = scmp.ne.s32.totalorder %s62, %s78
      %p80 = scmp.eq.s32.totalorder %s24, 0
      %p81 = por %p79, %p80
      %s82 = ssub.s32 %s25, %s51
      %s83 = ssub.s32 %s26, %s47
      %s84 = sor.u32 %s82, %s83
      %s85 = ssub.s32 %s28, %s39
      %s86 = sor.u32 %s84, %s85
      %p87 = scmp.eq.s32.totalorder %s86, 0
      %s89 = sadd.s32 %s88, 1
      %s90 = scalar_select %p87, %s88, %s89
      %p93 = pneg %p87
      %p94 = scmp.eq.s32.totalorder %s18, 7
      %p95 = por %p93, %p94
      %p96 = scmp.ne.s32.totalorder %s88, %s91
      %p97 = scmp.eq.s32.totalorder %s18, 0
      %p98 = por %p96, %p97
      %p99 = scmp.ne.s32.totalorder %s88, %s91
      %p100 = scmp.eq.s32.totalorder %s23, 7
      %p101 = por %p99, %p100
      %p102 = scmp.ne.s32.totalorder %s91, %s92
      %p103 = scmp.eq.s32.totalorder %s23, 0
      %p104 = por %p102, %p103
      %p105 = scmp.ne.s32.totalorder %s91, %s92
      %p106 = scmp.eq.s32.totalorder %s24, 7
      %p107 = por %p105, %p106
      %p109 = scmp.ne.s32.totalorder %s92, %s108
      %p110 = scmp.eq.s32.totalorder %s24, 0
      %p111 = por %p109, %p110
      %s112 = ssub.s32 %s25, %s51
      %s113 = ssub.s32 %s26, %s47
      %s114 = sor.u32 %s112, %s113
      %s115 = ssub.s32 %s28, %s39
      %s116 = sor.u32 %s114, %s115
      %p117 = scmp.eq.s32.totalorder %s116, 0
      %s119 = sadd.s32 %s118, 1
      %s120 = scalar_select %p117, %s118, %s119
      %p123 = pneg %p117
      %p124 = scmp.eq.s32.totalorder %s18, 7
      %p125 = por %p123, %p124
      %p126 = scmp.ne.s32.totalorder %s118, %s121
      %p127 = scmp.eq.s32.totalorder %s18, 0
      %p128 = por %p126, %p127
      %p129 = scmp.ne.s32.totalorder %s118, %s121
      %p130 = scmp.eq.s32.totalorder %s23, 7
      %p131 = por %p129, %p130
      %p132 = scmp.ne.s32.totalorder %s121, %s122
      %p133 = scmp.eq.s32.totalorder %s23, 0
      %p134 = por %p132, %p133
      %p135 = scmp.ne.s32.totalorder %s121, %s122
      %p136 = scmp.eq.s32.totalorder %s24, 7
      %p137 = por %p135, %p136
      %p139 = scmp.ne.s32.totalorder %s122, %s138
      %p140 = scmp.eq.s32.totalorder %s24, 0
      %p141 = por %p139, %p140
      %s142 = ssub.s32 %s25, %s51
      %s143 = ssub.s32 %s26, %s47
      %s144 = sor.u32 %s142, %s143
      %s145 = ssub.s32 %s27, %s43
      %s146 = sor.u32 %s144, %s145
      %p147 = scmp.eq.s32.totalorder %s146, 0
      %s149 = sadd.s32 %s148, 1
      %s150 = scalar_select %p147, %s148, %s149
      %p153 = pneg %p147
      %p154 = scmp.eq.s32.totalorder %s18, 7
      %p155 = por %p153, %p154
      %p156 = scmp.ne.s32.totalorder %s148, %s151
      %p157 = scmp.eq.s32.totalorder %s18, 0
      %p158 = por %p156, %p157
      %p159 = scmp.ne.s32.totalorder %s148, %s151
      %p160 = scmp.eq.s32.totalorder %s23, 7
      %p161 = por %p159, %p160
      %p162 = scmp.ne.s32.totalorder %s151, %s152
      %p163 = scmp.eq.s32.totalorder %s23, 0
      %p164 = por %p162, %p163
      %p165 = scmp.ne.s32.totalorder %s151, %s152
      %p166 = scmp.eq.s32.totalorder %s24, 7
      %p167 = por %p165, %p166
      %p169 = scmp.ne.s32.totalorder %s152, %s168
      %p170 = scmp.eq.s32.totalorder %s24, 0
      %p171 = por %p169, %p170
      %p172 = scmp.le.s32.totalorder 1, %s18
      %p173 = scmp.lt.s32.totalorder %s18, 9
      %p174 = pnand %p172, %p173
      %p175 = pneg %p174
      // Predicated region
      $region9: #{tpu_custom_call.1} parent=5 // pred_check
        _
      $region10: #{tpu_custom_call.1} parent=5 // pred_check_branch
        %177 = sbr.rel (%p174) target = $region12
      $region11: #{tpu_custom_call.1} parent=5 // pred_region
        %s178 = ssub.s32 %s18, 1
      $region12: #{tpu_custom_call.1} parent=5 // pred_fallthru
        _
      %p179 = scmp.lt.s32.totalorder %s18, 8
      // Predicated region
      $region13: #{tpu_custom_call.1} parent=5 // pred_check
        %p180 = pneg %p179
      $region14: #{tpu_custom_call.1} parent=5 // pred_check_branch
        %182 = sbr.rel (%p180) target = $region16
      $region15: #{tpu_custom_call.1} parent=5 // pred_region
        // Predicated region
        $region17: #{tpu_custom_call.1} parent=15 // pred_check
          %p183 = pneg %p68
        $region18: #{tpu_custom_call.1} parent=15 // pred_check_branch
          %185 = sbr.rel (%p183) target = $region20
        $region19: #{tpu_custom_call.1} parent=15 // pred_region
          %s186 = sand.u32 %s58, 1
          %s187 = scalar_lea.sflag [#allocation6], %s186
          %s188 = sand.u32 %s58, 1
          %s189 = smul.addr %s188, 8
          %s190 = scalar_lea.vmem [#allocation5], %s189
          %192 = vsyncadd %s187, 0
          %s193 = sadd.s32 %s27, %s26
          %s194 = smul.addr %s25, 4
          %s195 = sadd.s32 %s193, %s194
          %s196 = smul.addr %s195, 8
          %s197 = scalar_lea.hbm %s0, %s196
          %s199 = sshll.u32 %s197, 4
          %s200 = int_to_ptr.hbm [resolvable:$true] %s199
          %s201 = sshll.u32 %s190, 4
          %s202 = int_to_ptr.vmem [resolvable:$true] %s201
          %204 = dma.hbm_to_vmem [thread:$0]  %s200, 128, %s202, %s187
        $region20: #{tpu_custom_call.1} parent=15 // pred_fallthru
          _
        // Predicated region
        $region21: #{tpu_custom_call.1} parent=15 // pred_check
          %p205 = pneg %p98
        $region22: #{tpu_custom_call.1} parent=15 // pred_check_branch
          %207 = sbr.rel (%p205) target = $region24
        $region23: #{tpu_custom_call.1} parent=15 // pred_region
          %s208 = sand.u32 %s18, 1
          %s209 = scalar_lea.sflag [#allocation9], %s208
          %s210 = sand.u32 %s88, 1
          %s211 = smul.addr %s210, 8
          %s212 = scalar_lea.vmem [#allocation8], %s211
          %214 = vsyncadd %s209, 0
          %s215 = sadd.s32 %s28, %s26
          %s216 = smul.addr %s25, 4
          %s217 = sadd.s32 %s215, %s216
          %s218 = smul.addr %s217, 8
          %s219 = scalar_lea.hbm %s1, %s218
          %s221 = sshll.u32 %s219, 4
          %s222 = int_to_ptr.hbm [resolvable:$true] %s221
          %s223 = sshll.u32 %s212, 4
          %s224 = int_to_ptr.vmem [resolvable:$true] %s223
          %226 = dma.hbm_to_vmem [thread:$0]  %s222, 128, %s224, %s209
        $region24: #{tpu_custom_call.1} parent=15 // pred_fallthru
          _
        // Predicated region
        $region25: #{tpu_custom_call.1} parent=15 // pred_check
          %p227 = pneg %p128
        $region26: #{tpu_custom_call.1} parent=15 // pred_check_branch
          %229 = sbr.rel (%p227) target = $region28
        $region27: #{tpu_custom_call.1} parent=15 // pred_region
          %s230 = sand.u32 %s18, 1
          %s231 = scalar_lea.sflag [#allocation9], %s230
          %s232 = sand.u32 %s118, 1
          %s233 = smul.addr %s232, 8
          %s234 = scalar_lea.vmem [#allocation10], %s233
          %236 = vsyncadd %s231, 0
          %s237 = sadd.s32 %s28, %s26
          %s238 = smul.addr %s25, 4
          %s239 = sadd.s32 %s237, %s238
          %s240 = smul.addr %s239, 8
          %s241 = scalar_lea.hbm %s2, %s240
          %s243 = sshll.u32 %s241, 4
          %s244 = int_to_ptr.hbm [resolvable:$true] %s243
          %s245 = sshll.u32 %s234, 4
          %s246 = int_to_ptr.vmem [resolvable:$true] %s245
          %248 = dma.hbm_to_vmem [thread:$0]  %s244, 128, %s246, %s231
        $region28: #{tpu_custom_call.1} parent=15 // pred_fallthru
          _
      $region16: #{tpu_custom_call.1} parent=5 // pred_fallthru
        _
      %p249 = scmp.le.s32.totalorder 1, %s18
      %p250 = scmp.lt.s32.totalorder %s18, 9
      %p251 = pnand %p249, %p250
      %p252 = pneg %p251
      // Predicated region
      $region29: #{tpu_custom_call.1} parent=5 // pred_check
        _
      $region30: #{tpu_custom_call.1} parent=5 // pred_check_branch
        %254 = sbr.rel (%p251) target = $region32
      $region31: #{tpu_custom_call.1} parent=5 // pred_region
        %s255 = ssub.s32 %s18, 1
        %s256 = sand.u32 %s61, 1
        %s257 = scalar_lea.sflag [#allocation6], %s256
        %s258 = sand.u32 %s61, 1
        %s259 = smul.addr %s258, 8
        %s260 = scalar_lea.vmem [#allocation5], %s259
        // Predicated region
        $region33: #{tpu_custom_call.1} parent=31 // pred_check
          %p261 = pneg %p74
        $region34: #{tpu_custom_call.1} parent=31 // pred_check_branch
          %263 = sbr.rel (%p261) target = $region36
        $region35: #{tpu_custom_call.1} parent=31 // pred_region
          %265 = dma.done %s257, 128
        $region36: #{tpu_custom_call.1} parent=31 // pred_fallthru
          _
        %s266 = sand.u32 %s23, 1
        %s267 = scalar_lea.sflag [#allocation9], %s266
        %s268 = sand.u32 %s91, 1
        %s269 = smul.addr %s268, 8
        %s270 = scalar_lea.vmem [#allocation8], %s269
        // Predicated region
        $region37: #{tpu_custom_call.1} parent=31 // pred_check
          %p271 = pneg %p104
        $region38: #{tpu_custom_call.1} parent=31 // pred_check_branch
          %273 = sbr.rel (%p271) target = $region40
        $region39: #{tpu_custom_call.1} parent=31 // pred_region
          %275 = dma.done %s267, 128
        $region40: #{tpu_custom_call.1} parent=31 // pred_fallthru
          _
        %s276 = sand.u32 %s23, 1
        %s277 = scalar_lea.sflag [#allocation9], %s276
        %s278 = sand.u32 %s121, 1
        %s279 = smul.addr %s278, 8
        %s280 = scalar_lea.vmem [#allocation10], %s279
        // Predicated region
        $region41: #{tpu_custom_call.1} parent=31 // pred_check
          %p281 = pneg %p134
        $region42: #{tpu_custom_call.1} parent=31 // pred_check_branch
          %283 = sbr.rel (%p281) target = $region44
        $region43: #{tpu_custom_call.1} parent=31 // pred_region
          %285 = dma.done %s277, 128
        $region44: #{tpu_custom_call.1} parent=31 // pred_fallthru
          _
        %s286 = sand.u32 %s61, 1
        %s287 = scalar_lea.sflag [#allocation6], %s286
        %s288 = sand.u32 %s61, 1
        %s289 = smul.addr %s288, 8
        %s290 = scalar_lea.vmem [#allocation5], %s289
        %p291 = pneg %p74
        %p292 = pneg %p71
        %s293 = sand.u32 %s23, 1
        %s294 = scalar_lea.sflag [#allocation9], %s293
        %s295 = sand.u32 %s91, 1
        %s296 = smul.addr %s295, 8
        %s297 = scalar_lea.vmem [#allocation8], %s296
        %p298 = pneg %p104
        %p299 = pneg %p101
        %s300 = sand.u32 %s23, 1
        %s301 = scalar_lea.sflag [#allocation9], %s300
        %s302 = sand.u32 %s121, 1
        %s303 = smul.addr %s302, 8
        %s304 = scalar_lea.vmem [#allocation10], %s303
        %p305 = pneg %p134
        %p306 = pneg %p131
        %p307 = pneg %p164
        %p308 = pneg %p161
        %s309 = sand.u32 %s151, 1
        %s310 = scalar_lea.sflag [#allocation7], %s309
        %s311 = sand.u32 %s151, 1
        %s312 = smul.addr %s311, 8
        %s313 = scalar_lea.vmem [#allocation11], %s312
        %p314 = scmp.eq.s32.totalorder %s32, 0
        // Predicated region
        $region45: #{tpu_custom_call.1} parent=31 // pred_check
          %p315 = pneg %p314
        $region46: #{tpu_custom_call.1} parent=31 // pred_check_branch
          %317 = sbr.rel (%p315) target = $region48
        $region47: #{tpu_custom_call.1} parent=31 // pred_region
          %vm318 = vcmask 7168
          %319 = vst.msk [vmem:[#allocation2] sm:$0xff] %vm318, -inf
          %320 = vst.msk [vmem:[#allocation3] sm:$0xff] %vm318, 0.0
          %vm321 = vcmask 261120
          %322 = vst.msk [vmem:[#allocation4] sm:$0xff] %vm321, 0.0
        $region48: #{tpu_custom_call.1} parent=31 // pred_fallthru
          _
        %s323 = smul.u32 %s32, 8
        %s324 = sadd.s32 %s31, 1
        %s325 = smul.u32 %s324, 8
        %s326 = ssub.s32 %s325, 1
        %p327 = scmp.le.s32.totalorder %s323, %s326
        // Predicated region
        $region49: #{tpu_custom_call.1} parent=31 // pred_check
          %p328 = pneg %p327
        $region50: #{tpu_custom_call.1} parent=31 // pred_check_branch
          %330 = sbr.rel (%p328) target = $region52
        $region51: #{tpu_custom_call.1} parent=31 // pred_region
          %v331 = vld [vmem:[%s260] sm:$0xff]
          %v332 = vld [vmem:[%s270] sm:$0xff]
          %vm333 = vcmask 261120
          %v335 = vsel %vm333, %v331, 0
          %v338 = vsel %vm333, %v332, 0
          %340 = vmatpush.xpose.msra.mxu0 0.0
          %341 = vmatpush.xpose.msra.mxu0 0.0
          %342 = vmatpush.xpose.msra.mxu0 0.0
          %343 = vmatpush.xpose.msra.mxu0 0.0
          %344 = vmatpush.xpose.msra.mxu0 0.0
          %345 = vmatpush.xpose.msra.mxu0 0.0
          %346 = vmatpush.xpose.msra.mxu0 0.0
          %347 = vmatpush.xpose.msra.mxu0 0.0
          %348 = vmatpush.xpose.msra.mxu0 0.0
          %349 = vmatpush.xpose.msra.mxu0 0.0
          %350 = vmatpush.xpose.msra.mxu0 0.0
          %351 = vmatpush.xpose.msra.mxu0 0.0
          %352 = vmatpush.xpose.msra.mxu0 0.0
          %353 = vmatpush.xpose.msra.mxu0 0.0
          %354 = vmatpush.xpose.msra.mxu0 0.0
          %355 = vmatpush.xpose.msra.mxu0 %v338
          %356 = vmatmul.f32.gmra.mxu0 %v335
          %v357 = vpop.f32.mrf.mxu0
          %v358 = vadd.f32 0.0, %v357
          %359 = vdwg.mxu0
          %v360 = vlaneseq
          %v361 = vshrl.u32 %v360, 7
          %s362 = smul.u32 %s31, 8
          %v363 = vstv %s362
          %v364 = vadd.s32 %v361, %v363
          %v365 = vlaneseq
          %v366 = vand.u32 %v365, 127
          %v367 = vstv %s323
          %v368 = vadd.s32 %v366, %v367
          %vm369 = vcmp.ge.s32.totalorder %v364, %v368
          %v370 = vsel %vm369, %v358, -4.2949673e+09
          %v371 = vmul.f32 %v370, 0.17677669
          %v372 = vld [vmem:[#allocation2] sm:$0xff]
          %vm373 = vcmask 64512
          %v374 = vsel %vm373, %v371, -inf
          %375 = vmax.xlane.f32.xlu0 %v374
          %v376 = vpop.xlane.xlu0 %375
          %v377 = vmax.f32 %v372, %v376
          %v378 = vsub.f32 %v372, %v377
          %v379 = vmul.f32 %v378, 1.442695
          %v380 = vpow.pop %v379
          %382 = vset.pattern.permute.xlu0 0
          %383 = vperm.xlu0 %382, %v377
          %v384 = vpop.permute.xlu0 %383
          %v386 = vsub.f32 %v371, %v384
          %v387 = vmul.f32 %v386, 1.442695
          %v388 = vpow.pop %v387
          %v389 = vld [vmem:[#allocation3] sm:$0xff]
          %v390 = vmul.f32 %v380, %v389
          %v391 = vsel %vm373, %v388, 0.0
          %392 = vadd.xlane.f32.xlu0 %v391
          %v393 = vpop.xlane.xlu0 %392
          %v394 = vadd.f32 %v390, %v393
          %vm395 = vcmask 7168
          %396 = vst.msk [vmem:[#allocation3] sm:$0xff] %vm395, %v394
          %v397 = vld [vmem:[#allocation4] sm:$0xff]
          %399 = vset.pattern.permute.xlu0 0
          %400 = vperm.xlu0 %399, %v380
          %v401 = vpop.permute.xlu0 %400
          %v403 = vmul.f32 %v401, %v397
          %v404 = vld [vmem:[%s280] sm:$0xff]
          %v406 = vsel %vm373, %v388, 0
          %408 = vmatpush.msra.mxu0 0.0
          %409 = vmatpush.msra.mxu0 0.0
          %410 = vmatpush.msra.mxu0 0.0
          %411 = vmatpush.msra.mxu0 0.0
          %412 = vmatpush.msra.mxu0 0.0
          %413 = vmatpush.msra.mxu0 0.0
          %414 = vmatpush.msra.mxu0 0.0
          %415 = vmatpush.msra.mxu0 0.0
          %416 = vmatpush.msra.mxu0 0.0
          %417 = vmatpush.msra.mxu0 0.0
          %418 = vmatpush.msra.mxu0 0.0
          %419 = vmatpush.msra.mxu0 0.0
          %420 = vmatpush.msra.mxu0 0.0
          %421 = vmatpush.msra.mxu0 0.0
          %422 = vmatpush.msra.mxu0 0.0
          %423 = vmatpush.msra.mxu0 %v404
          %424 = vmatmul.f32.gmra.mxu0 %v406
          %v425 = vpop.f32.mrf.mxu0
          %v426 = vadd.f32 0.0, %v425
          %427 = vdwg.mxu0
          %v428 = vadd.f32 %v403, %v426
          %429 = vst.msk [vmem:[#allocation4] sm:$0xff] %vm333, %v428
          %430 = vst.msk [vmem:[#allocation2] sm:$0xff] %vm395, %v377
        $region52: #{tpu_custom_call.1} parent=31 // pred_fallthru
          _
        // Predicated region
        $region53: #{tpu_custom_call.1} parent=31 // pred_check
          %p431 = pneg %p314
        $region54: #{tpu_custom_call.1} parent=31 // pred_check_branch
          %433 = sbr.rel (%p431) target = $region56
        $region55: #{tpu_custom_call.1} parent=31 // pred_region
          %v434 = vld [vmem:[#allocation3] sm:$0xff]
          %v435 = vrcp.pop %v434
          %v436 = vmul.f32 %v434, %v435
          %v437 = vsub.f32 1.0, %v436
          %v438 = vmul.f32 %v435, %v437
          %v439 = vadd.f32 %v435, %v438
          %vm440 = vweird.f32 %v434
          %vm441 = vweird.f32 %v435
          %vm442 = vmor %vm440, %vm441
          %v443 = vsel %vm442, %v435, %v439
          %v444 = vand.u32 2147483647, %v434
          %vm445 = vcmp.eq.f32.partialorder %v444, 8.507059e+37
          %v446 = vand.u32 %v434, 2147483648
          %v447 = vor.u32 1.1754944e-38, %v446
          %v448 = vsel %vm445, %v447, %v443
          %v449 = vld [vmem:[#allocation4] sm:$0xff]
          %451 = vset.pattern.permute.xlu0 0
          %452 = vperm.xlu0 %451, %v448
          %v453 = vpop.permute.xlu0 %452
          %v455 = vmul.f32 %v449, %v453
          %vm456 = vcmask 261120
          %457 = vst.msk [vmem:[%s313] sm:$0xff] %vm456, %v455
        $region56: #{tpu_custom_call.1} parent=31 // pred_fallthru
          _
        %s458 = sand.u32 %s151, 1
        %s459 = scalar_lea.sflag [#allocation7], %s458
        %s460 = sand.u32 %s151, 1
        %s461 = smul.addr %s460, 8
        %s462 = scalar_lea.vmem [#allocation11], %s461
        // Predicated region
        $region57: #{tpu_custom_call.1} parent=31 // pred_check
          %p463 = pneg %p161
        $region58: #{tpu_custom_call.1} parent=31 // pred_check_branch
          %465 = sbr.rel (%p463) target = $region60
        $region59: #{tpu_custom_call.1} parent=31 // pred_region
          %467 = vsyncadd %s459, 0
          %s468 = sadd.s32 %s31, %s30
          %s469 = smul.addr %s29, 4
          %s470 = sadd.s32 %s468, %s469
          %s471 = smul.addr %s470, 8
          %s472 = scalar_lea.hbm %s3, %s471
          %s474 = sshll.u32 %s462, 4
          %s475 = int_to_ptr.vmem [resolvable:$true] %s474
          %s476 = sshll.u32 %s472, 4
          %s477 = int_to_ptr.hbm [resolvable:$true] %s476
          %479 = dma.vmem_to_hbm [thread:$0]  %s475, 128, %s477, %s459
        $region60: #{tpu_custom_call.1} parent=31 // pred_fallthru
          _
      $region32: #{tpu_custom_call.1} parent=5 // pred_fallthru
        _
      %p480 = scmp.le.s32.totalorder 2, %s18
      // Predicated region
      $region61: #{tpu_custom_call.1} parent=5 // pred_check
        %p481 = pneg %p480
      $region62: #{tpu_custom_call.1} parent=5 // pred_check_branch
        %483 = sbr.rel (%p481) target = $region64
      $region63: #{tpu_custom_call.1} parent=5 // pred_region
        %s484 = ssub.s32 %s18, 2
        // Predicated region
        $region65: #{tpu_custom_call.1} parent=63 // pred_check
          %p485 = pneg %p167
        $region66: #{tpu_custom_call.1} parent=63 // pred_check_branch
          %487 = sbr.rel (%p485) target = $region68
        $region67: #{tpu_custom_call.1} parent=63 // pred_region
          %s488 = sand.u32 %s152, 1
          %s489 = scalar_lea.sflag [#allocation7], %s488
          %s490 = sand.u32 %s152, 1
          %s491 = smul.addr %s490, 8
          %s492 = scalar_lea.vmem [#allocation11], %s491
          %494 = dma.done %s489, 128
        $region68: #{tpu_custom_call.1} parent=63 // pred_fallthru
          _
      $region64: #{tpu_custom_call.1} parent=5 // pred_fallthru
        _
    $region6: #{tpu_custom_call.1} parent=1 // loop_footer
      %s22 = sadd.s32 1, %s18
    $region7: #{tpu_custom_call.1} parent=1 // loop_footer_branch
      %17 = sbr.rel target = $region3
    $region8: #{tpu_custom_call.1} parent=1 // loop_exit
      _
    %495 = vsyncpa [#allocation6], 1
    %s496 = scalar_lea.sflag [#allocation6], 1
    %497 = vsyncpa %s496, 1
    %498 = vsyncpa [#allocation9], 1
    %s499 = scalar_lea.sflag [#allocation9], 1
    %500 = vsyncpa %s499, 1
    %501 = vsyncpa [#allocation7], 1
    %s502 = scalar_lea.sflag [#allocation7], 1
    %503 = vsyncpa %s502, 1

</llo_original>
